<compile_context>
chip_gen: v6e
topology: v6e:2x2x1
jax: 0.10.0
libtpu: 0.0.40
codegen_flags: <defaults>
</compile_context>

<pallas_src>
import jax
import jax.numpy as jnp
from jax.experimental import pallas as pl
from jax.experimental.pallas import tpu as pltpu


# ---------------------------------------------------------------------------
# Predictor kernel: B_TILE batch elements of single-head self-attention per
# grid step.  Full attn map is written out; pred is only materialized for the
# CLS (query 0) row, which is all the head's loss needs.
# ---------------------------------------------------------------------------
def _predictor_kernel(x_ref, wqkv_ref, bqkv_ref, wo_ref, bo_ref,
                      attn_ref, pred_cls_ref):
    bt, s, c = x_ref.shape
    x = x_ref[...]                                     # (B_TILE, S, C)

    # Fused QKV projection: one bf16 MXU pass, M = B_TILE*S, N = 3C,
    # f32 accumulation via preferred_element_type.
    x2 = x.reshape(bt * s, c).astype(jnp.bfloat16)
    qkv = jnp.dot(x2, wqkv_ref[...],
                  preferred_element_type=jnp.float32) + bqkv_ref[...]

    scale = 1.0 / jnp.sqrt(jnp.float32(c))             # folded into q (S*C elems)
    q = (qkv[:, :c] * scale).reshape(bt, s, c).astype(jnp.bfloat16)
    k = qkv[:, c:2 * c].reshape(bt, s, c).astype(jnp.bfloat16)
    v = qkv[:, 2 * c:].reshape(bt, s, c).astype(jnp.bfloat16)

    # Batched scores: contraction on the last dim of both operands (no k.T).
    scores = jnp.einsum("bqd,bkd->bqk", q, k,
                        preferred_element_type=jnp.float32)        # (B, S, S)
    scores = scores - jnp.max(scores, axis=-1, keepdims=True)
    e = jnp.exp(scores)                                            # f32 softmax
    inv_denom = pl.reciprocal(jnp.sum(e, axis=-1, keepdims=True), approx=True)
    attn = e * inv_denom                                           # (B, S, S)
    attn_ref[...] = attn.astype(attn_ref.dtype)

    # CLS-only tail: context / projection / residual for query row 0 only.
    attn0 = attn[:, 0:1, :].astype(jnp.bfloat16)                   # (B, 1, S)
    ctx0 = jnp.einsum("bqk,bkd->bqd", attn0, v,
                      preferred_element_type=jnp.float32)          # (B, 1, C)
    proj0 = jnp.dot(ctx0.reshape(bt, c).astype(jnp.bfloat16), wo_ref[...],
                    preferred_element_type=jnp.float32) + bo_ref[...]   # (B, C)
    x_cls = x[:, 0, :].astype(jnp.float32)                         # (B, C)
    pred_cls_ref[...] = (x_cls + proj0).reshape(bt, 1, c).astype(pred_cls_ref.dtype)


def _choose_b_tile(n, max_tile=8):
    # Largest divisor of n (<= max_tile) that still leaves >= 2 grid steps
    # (so both v7x TensorCores get work); otherwise any divisor.
    for t in range(min(n, max_tile), 0, -1):
        if n % t == 0 and n // t >= 2:
            return t
    for t in range(min(n, max_tile), 0, -1):
        if n % t == 0:
            return t
    return 1


def predictor_forward(x, params, *, b_tile=None, attn_dtype=None):
    N, S, C = x.shape
    if b_tile is None:
        b_tile = _choose_b_tile(N)
    assert N % b_tile == 0, "batch must be divisible by b_tile"
    if attn_dtype is None:
        attn_dtype = x.dtype  # pass jnp.bfloat16 to halve the attn HBM writeback

    wqkv, bqkv, wo, bo = params["wqkv"], params["bqkv"], params["wo"], params["bo"]

    flops = (6 * N * S * C * C        # fused QKV projection
             + 2 * N * S * S * C      # scores
             + 2 * N * S * C          # CLS context row
             + 2 * N * C * C)         # CLS output projection
    bytes_accessed = (
        N * S * C * jnp.dtype(x.dtype).itemsize            # x in
        + wqkv.size * jnp.dtype(wqkv.dtype).itemsize
        + bqkv.size * jnp.dtype(bqkv.dtype).itemsize
        + wo.size * jnp.dtype(wo.dtype).itemsize
        + bo.size * jnp.dtype(bo.dtype).itemsize
        + N * S * S * jnp.dtype(attn_dtype).itemsize        # attn out
        + N * C * 4)                                         # pred CLS out (f32)

    attn, pred_cls = pl.pallas_call(
        _predictor_kernel,
        grid=(N // b_tile,),
        in_specs=[
            pl.BlockSpec((b_tile, S, C), lambda b: (b, 0, 0)),   # x
            pl.BlockSpec((C, 3 * C), lambda b: (0, 0)),          # Wqkv (grid-invariant, bf16)
            pl.BlockSpec((1, 3 * C), lambda b: (0, 0)),          # bqkv
            pl.BlockSpec((C, C), lambda b: (0, 0)),              # Wo (bf16)
            pl.BlockSpec((1, C), lambda b: (0, 0)),              # bo
        ],
        out_specs=[
            pl.BlockSpec((b_tile, S, S), lambda b: (b, 0, 0)),   # attn
            pl.BlockSpec((b_tile, 1, C), lambda b: (b, 0, 0)),   # pred CLS row
        ],
        out_shape=[
            jax.ShapeDtypeStruct((N, S, S), attn_dtype),
            jax.ShapeDtypeStruct((N, 1, C), jnp.float32),
        ],
        compiler_params=pltpu.CompilerParams(
            # Batch axis is independent across programs -> megacore sharding.
            # For large C / S raise vmem_limit_bytes here so b_tile can stay
            # large (weights are already bf16 to keep the working set small).
            dimension_semantics=("parallel",),
        ),
        cost_estimate=pl.CostEstimate(
            flops=flops,
            transcendentals=N * S * S,
            bytes_accessed=bytes_accessed),
    )(x, wqkv, bqkv, wo, bo)
    return pred_cls[:, 0, :], attn


# ---------------------------------------------------------------------------
# CLS cosine loss in plain JAX (a separate Pallas call only adds launch + HBM
# round-trip overhead for a tiny (N, C) -> scalar reduction).
# Matches F.normalize (eps=1e-12 clamp) and the PyTorch loss exactly:
# loss = -2 * sum(pn * tn); if size_average: loss = loss / bs + 2.
# ---------------------------------------------------------------------------
def cls_cosine_loss(pred_cls, target_cls, size_average=True):
    p = pred_cls.astype(jnp.float32)
    t = target_cls.astype(jnp.float32)
    eps = jnp.float32(1e-12)
    pn = p / jnp.maximum(jnp.sqrt(jnp.sum(p * p, axis=1, keepdims=True)), eps)
    tn = t / jnp.maximum(jnp.sqrt(jnp.sum(t * t, axis=1, keepdims=True)), eps)
    loss = -2.0 * jnp.sum(pn * tn)
    if size_average:
        loss = loss / p.shape[0] + 2.0
    return loss


# ---------------------------------------------------------------------------
# Head wrapper == TransPredictHead.forward
# ---------------------------------------------------------------------------
def trans_predict_head(inp, target, params, size_average=True):
    pred_cls, attn = predictor_forward(inp, params)
    loss = cls_cosine_loss(pred_cls, target[:, 0], size_average=size_average)
    return dict(loss=loss, attn=attn)


def init_predictor_params(key, C, weight_dtype=jnp.bfloat16):
    kq, kk, kv, ko = jax.random.split(key, 4)
    std = 0.02
    wq = std * jax.random.normal(kq, (C, C), jnp.float32)
    wk = std * jax.random.normal(kk, (C, C), jnp.float32)
    wv = std * jax.random.normal(kv, (C, C), jnp.float32)
    wo = std * jax.random.normal(ko, (C, C), jnp.float32)
    return {
        "wqkv": jnp.concatenate([wq, wk, wv], axis=1).astype(weight_dtype),  # (C, 3C)
        "bqkv": jnp.zeros((1, 3 * C), jnp.float32),
        "wo": wo.astype(weight_dtype),
        "bo": jnp.zeros((1, C), jnp.float32),
    }


if __name__ == "__main__":
    key = jax.random.PRNGKey(0)
    k_in, k_tgt, k_par = jax.random.split(key, 3)

    N, S, C = 4, 8, 32   # batch, tokens (HW), channels -- small test shapes
    x = jax.random.normal(k_in, (N, S, C), jnp.float32)
    tgt = jax.random.normal(k_tgt, (N, S, C), jnp.float32)
    params = init_predictor_params(k_par, C)

    out = trans_predict_head(x, tgt, params, size_average=True)
    jax.block_until_ready(out["loss"])
    jax.block_until_ready(out["attn"])
    assert out["attn"].shape == (N, S, S)
    assert out["loss"].shape == ()
    assert bool(jnp.isfinite(out["loss"]))
    print("KERNEL_OK")
</pallas_src>

<mosaic_0001>
module attributes {stable_mosaic.version = 11 : i64} {
  func.func @_predictor_kernel(%arg0: i32, %arg1: memref<2x8x32xf32, #tpu.memory_space<vmem>>, %arg2: memref<32x96xbf16, #tpu.memory_space<vmem>>, %arg3: memref<1x96xf32, #tpu.memory_space<vmem>>, %arg4: memref<32x32xbf16, #tpu.memory_space<vmem>>, %arg5: memref<1x32xf32, #tpu.memory_space<vmem>>, %arg6: memref<2x8x8xf32, #tpu.memory_space<vmem>>, %arg7: memref<2x1x32xf32, #tpu.memory_space<vmem>>) attributes {dimension_semantics = [#tpu.dimension_semantics<parallel>], iteration_bounds = array<i64: 2>, scalar_prefetch = 0 : i64, scratch_operands = 0 : i64, tpu.core_type = #tpu.core_type<tc>, window_params = [{transform_indices = @transform_0, window_bounds = array<i64: 2, 8, 32>}, {pipeline_mode = #tpu.pipeline_mode<synchronous>, transform_indices = @transform_1, window_bounds = array<i64: 32, 96>}, {pipeline_mode = #tpu.pipeline_mode<synchronous>, transform_indices = @transform_2, window_bounds = array<i64: 1, 96>}, {pipeline_mode = #tpu.pipeline_mode<synchronous>, transform_indices = @transform_3, window_bounds = array<i64: 32, 32>}, {pipeline_mode = #tpu.pipeline_mode<synchronous>, transform_indices = @transform_4, window_bounds = array<i64: 1, 32>}, {transform_indices = @transform_5, window_bounds = array<i64: 2, 8, 8>}, {transform_indices = @transform_6, window_bounds = array<i64: 2, 1, 32>}]} {
    %c0 = arith.constant 0 : index
    %c0_0 = arith.constant 0 : index
    %c0_1 = arith.constant 0 : index
    %0 = vector.load %arg1[%c0, %c0_0, %c0_1] : memref<2x8x32xf32, #tpu.memory_space<vmem>>, vector<2x8x32xf32>
    %1 = vector.shape_cast %0 : vector<2x8x32xf32> to vector<16x32xf32>
    %2 = arith.truncf %1 : vector<16x32xf32> to vector<16x32xbf16>
    %c0_2 = arith.constant 0 : index
    %c0_3 = arith.constant 0 : index
    %3 = vector.load %arg2[%c0_2, %c0_3] : memref<32x96xbf16, #tpu.memory_space<vmem>>, vector<32x96xbf16>
    %cst = arith.constant dense<0.000000e+00> : vector<16x96xf32>
    %4 = tpu.matmul %2, %3, %cst {dimension_numbers = #tpu.dot_dimension_numbers<[1], [0], [0], [1], [0, 0, 1, 1], [], []>} : vector<16x32xbf16>, vector<32x96xbf16>, vector<16x96xf32> -> vector<16x96xf32>
    %c0_4 = arith.constant 0 : index
    %c0_5 = arith.constant 0 : index
    %5 = vector.load %arg3[%c0_4, %c0_5] : memref<1x96xf32, #tpu.memory_space<vmem>>, vector<1x96xf32>
    %6 = vector.broadcast %5 : vector<1x96xf32> to vector<16x96xf32>
    %7 = arith.addf %4, %6 : vector<16x96xf32>
    %cst_6 = arith.constant 3.200000e+01 : f32
    %8 = math.sqrt %cst_6 : f32
    %cst_7 = arith.constant 1.000000e+00 : f32
    %9 = arith.divf %cst_7, %8 : f32
    %10 = vector.extract_strided_slice %7 {offsets = [0, 0], sizes = [16, 32], strides = [1, 1]} : vector<16x96xf32> to vector<16x32xf32>
    %11 = vector.broadcast %9 : f32 to vector<16x32xf32>
    %12 = arith.mulf %10, %11 : vector<16x32xf32>
    %13 = vector.shape_cast %12 : vector<16x32xf32> to vector<2x8x32xf32>
    %14 = arith.truncf %13 : vector<2x8x32xf32> to vector<2x8x32xbf16>
    %15 = vector.extract_strided_slice %7 {offsets = [0, 32], sizes = [16, 32], strides = [1, 1]} : vector<16x96xf32> to vector<16x32xf32>
    %16 = vector.shape_cast %15 : vector<16x32xf32> to vector<2x8x32xf32>
    %17 = arith.truncf %16 : vector<2x8x32xf32> to vector<2x8x32xbf16>
    %18 = vector.extract_strided_slice %7 {offsets = [0, 64], sizes = [16, 32], strides = [1, 1]} : vector<16x96xf32> to vector<16x32xf32>
    %19 = vector.shape_cast %18 : vector<16x32xf32> to vector<2x8x32xf32>
    %20 = arith.truncf %19 : vector<2x8x32xf32> to vector<2x8x32xbf16>
    "tpu.trace_start"() <{level = 10 : i32, message = "bqd,bkd->bqk"}> : () -> ()
    %cst_8 = arith.constant dense<0.000000e+00> : vector<2x8x8xf32>
    %21 = tpu.matmul %14, %17, %cst_8 {dimension_numbers = #tpu.dot_dimension_numbers<[2], [2], [1], [1], [0, 0, 0, 1, 1, 1], [0], [0]>} : vector<2x8x32xbf16>, vector<2x8x32xbf16>, vector<2x8x8xf32> -> vector<2x8x8xf32>
    "tpu.trace_stop"() : () -> ()
    %cst_9 = arith.constant dense<0xFF800000> : vector<2x8xf32>
    %22 = vector.multi_reduction <maximumf>, %21, %cst_9 [2] : vector<2x8x8xf32> to vector<2x8xf32>
    %23 = vector.shape_cast %22 : vector<2x8xf32> to vector<2x8x1xf32>
    %24 = vector.broadcast %23 : vector<2x8x1xf32> to vector<2x8x8xf32>
    %25 = arith.subf %21, %24 : vector<2x8x8xf32>
    %26 = math.exp %25 : vector<2x8x8xf32>
    %cst_10 = arith.constant dense<0.000000e+00> : vector<2x8xf32>
    %27 = vector.multi_reduction <add>, %26, %cst_10 [2] : vector<2x8x8xf32> to vector<2x8xf32>
    %28 = vector.shape_cast %27 : vector<2x8xf32> to vector<2x8x1xf32>
    %29 = tpu.reciprocal %28 {approx = true} : vector<2x8x1xf32> -> vector<2x8x1xf32>
    %30 = vector.broadcast %29 : vector<2x8x1xf32> to vector<2x8x8xf32>
    %31 = arith.mulf %26, %30 : vector<2x8x8xf32>
    %c0_11 = arith.constant 0 : index
    %c0_12 = arith.constant 0 : index
    %c0_13 = arith.constant 0 : index
    %32 = vector.load %arg6[%c0_11, %c0_12, %c0_13] : memref<2x8x8xf32, #tpu.memory_space<vmem>>, vector<2x8x8xf32>
    tpu.vector_store %arg6[%c0_11, %c0_12, %c0_13], %31 {strides = array<i32>} : memref<2x8x8xf32, #tpu.memory_space<vmem>>, vector<2x8x8xf32>,
    %33 = vector.extract_strided_slice %31 {offsets = [0, 0, 0], sizes = [2, 1, 8], strides = [1, 1, 1]} : vector<2x8x8xf32> to vector<2x1x8xf32>
    %34 = arith.truncf %33 : vector<2x1x8xf32> to vector<2x1x8xbf16>
    "tpu.trace_start"() <{level = 10 : i32, message = "bqk,bkd->bqd"}> : () -> ()
    %cst_14 = arith.constant dense<0.000000e+00> : vector<2x1x32xf32>
    %35 = tpu.matmul %34, %20, %cst_14 {dimension_numbers = #tpu.dot_dimension_numbers<[2], [1], [1], [2], [0, 0, 0, 1, 1, 2], [0], [0]>} : vector<2x1x8xbf16>, vector<2x8x32xbf16>, vector<2x1x32xf32> -> vector<2x1x32xf32>
    "tpu.trace_stop"() : () -> ()
    %36 = vector.shape_cast %35 : vector<2x1x32xf32> to vector<2x32xf32>
    %37 = arith.truncf %36 : vector<2x32xf32> to vector<2x32xbf16>
    %c0_15 = arith.constant 0 : index
    %c0_16 = arith.constant 0 : index
    %38 = vector.load %arg4[%c0_15, %c0_16] : memref<32x32xbf16, #tpu.memory_space<vmem>>, vector<32x32xbf16>
    %cst_17 = arith.constant dense<0.000000e+00> : vector<2x32xf32>
    %39 = tpu.matmul %37, %38, %cst_17 {dimension_numbers = #tpu.dot_dimension_numbers<[1], [0], [0], [1], [0, 0, 1, 1], [], []>} : vector<2x32xbf16>, vector<32x32xbf16>, vector<2x32xf32> -> vector<2x32xf32>
    %c0_18 = arith.constant 0 : index
    %c0_19 = arith.constant 0 : index
    %40 = vector.load %arg5[%c0_18, %c0_19] : memref<1x32xf32, #tpu.memory_space<vmem>>, vector<1x32xf32>
    %41 = vector.broadcast %40 : vector<1x32xf32> to vector<2x32xf32>
    %42 = arith.addf %39, %41 : vector<2x32xf32>
    %43 = vector.extract_strided_slice %0 {offsets = [0, 0, 0], sizes = [2, 1, 32], strides = [1, 1, 1]} : vector<2x8x32xf32> to vector<2x1x32xf32>
    %44 = vector.shape_cast %43 : vector<2x1x32xf32> to vector<2x32xf32>
    %45 = arith.addf %44, %42 : vector<2x32xf32>
    %46 = vector.shape_cast %45 : vector<2x32xf32> to vector<2x1x32xf32>
    %c0_20 = arith.constant 0 : index
    %c0_21 = arith.constant 0 : index
    %c0_22 = arith.constant 0 : index
    %47 = vector.load %arg7[%c0_20, %c0_21, %c0_22] : memref<2x1x32xf32, #tpu.memory_space<vmem>>, vector<2x1x32xf32>
    tpu.vector_store %arg7[%c0_20, %c0_21, %c0_22], %46 {strides = array<i32>} : memref<2x1x32xf32, #tpu.memory_space<vmem>>, vector<2x1x32xf32>,
    return
  }
  func.func @transform_0(%arg0: i32) -> (i32, i32, i32) {
    %c0_i32 = arith.constant 0 : i32
    %c0_i32_0 = arith.constant 0 : i32
    %c0_i32_1 = arith.constant 0 : i32
    return %arg0, %c0_i32, %c0_i32_0 : i32, i32, i32
  }
  func.func @transform_1(%arg0: i32) -> (i32, i32) {
    %c0_i32 = arith.constant 0 : i32
    %c0_i32_0 = arith.constant 0 : i32
    %c0_i32_1 = arith.constant 0 : i32
    return %c0_i32, %c0_i32_0 : i32, i32
  }
  func.func @transform_2(%arg0: i32) -> (i32, i32) {
    %c0_i32 = arith.constant 0 : i32
    %c0_i32_0 = arith.constant 0 : i32
    %c0_i32_1 = arith.constant 0 : i32
    return %c0_i32, %c0_i32_0 : i32, i32
  }
  func.func @transform_3(%arg0: i32) -> (i32, i32) {
    %c0_i32 = arith.constant 0 : i32
    %c0_i32_0 = arith.constant 0 : i32
    %c0_i32_1 = arith.constant 0 : i32
    return %c0_i32, %c0_i32_0 : i32, i32
  }
  func.func @transform_4(%arg0: i32) -> (i32, i32) {
    %c0_i32 = arith.constant 0 : i32
    %c0_i32_0 = arith.constant 0 : i32
    %c0_i32_1 = arith.constant 0 : i32
    return %c0_i32, %c0_i32_0 : i32, i32
  }
  func.func @transform_5(%arg0: i32) -> (i32, i32, i32) {
    %c0_i32 = arith.constant 0 : i32
    %c0_i32_0 = arith.constant 0 : i32
    %c0_i32_1 = arith.constant 0 : i32
    return %arg0, %c0_i32, %c0_i32_0 : i32, i32, i32
  }
  func.func @transform_6(%arg0: i32) -> (i32, i32, i32) {
    %c0_i32 = arith.constant 0 : i32
    %c0_i32_0 = arith.constant 0 : i32
    %c0_i32_1 = arith.constant 0 : i32
    return %arg0, %c0_i32, %c0_i32_0 : i32, i32, i32
  }
}

</mosaic_0001>

<llo_original>
// kernel: tpu_custom_call.1
$region0: #{tpu_custom_call.1}
  #allocation0 [shape = 'u32[]', space=smem, size = 0x4, offset = 0x4, fixed_abs, tag = 'smem constant byte address 0x4 - core index']
  #allocation1 [shape = 'u32[144,128]{1,0:T(1,128)}', space=vmem, size = 0x12000, scoped, tag = 'internal scratch']
  %s0 = inlined_call_operand.hbm [shape: f32[4,8,32], index: 0, kind: input, shape index: {}]
  %s1 = inlined_call_operand.hbm [shape: bf16[32,96], index: 1, kind: input, shape index: {}]
  %s2 = inlined_call_operand.vmem [shape: f32[1,96], index: 2, kind: input, shape index: {}]
  %s3 = inlined_call_operand.hbm [shape: bf16[32,32], index: 3, kind: input, shape index: {}]
  %s4 = inlined_call_operand.vmem [shape: f32[1,32], index: 4, kind: input, shape index: {}]
  %s5 = inlined_call_operand.hbm [shape: f32[4,8,8], index: 5, kind: output, shape index: {0}]
  %s6 = inlined_call_operand.hbm [shape: f32[4,1,32], index: 6, kind: output, shape index: {1}]
  %7 = xla_tuple %s5, %s6
  %s8 = sld [smem:[#allocation0]]
  $region73: #{tpu_custom_call.1} parent=0
    _
  %s10 = ssub.s32 1, %s8
  %s11 = scalar_select 0, %s10, %s8
  $region1: #{tpu_custom_call.1} parent=0
    #allocation2 [shape = 'u8[16384]{0}', space=vmem, size = 0x4000, scoped, tag = 'input window, operand 0']
    #allocation3 [shape = 's32[2]{0}', space=sflag, size = 0x8, scoped, tag = 'scoped memory for tpu_custom_call.1']
    #allocation4 [shape = 's32[2]{0}', space=sflag, size = 0x8, scoped, tag = 'scoped memory for tpu_custom_call.1']
    #allocation5 [shape = 'u8[8192]{0}', space=vmem, size = 0x2000, scoped, tag = 'input window, operand 1, single buffered']
    #allocation6 [shape = 's32[1]{0}', space=sflag, size = 0x4, scoped, tag = 'scoped memory for tpu_custom_call.1']
    #allocation7 [shape = 'u8[8192]{0}', space=vmem, size = 0x2000, scoped, tag = 'input window, operand 3, single buffered']
    #allocation8 [shape = 'u8[16384]{0}', space=vmem, size = 0x4000, scoped, tag = 'output window, operand 0']
    #allocation9 [shape = 'u8[2048]{0}', space=vmem, size = 0x800, scoped, tag = 'output window, operand 1']
    #allocation10 [shape = 's32[2]{0}', space=sflag, size = 0x8, scoped, tag = 'scoped memory for tpu_custom_call.1']
    %12 = vsyncpa [#allocation3], 0
    %s13 = scalar_lea.sflag [#allocation3], 1
    %14 = vsyncpa %s13, 0
    %15 = vsyncpa [#allocation6], 0
    %16 = vsyncpa [#allocation4], 0
    %s17 = scalar_lea.sflag [#allocation4], 1
    %18 = vsyncpa %s17, 0
    %19 = vsyncpa [#allocation10], 0
    %s20 = scalar_lea.sflag [#allocation10], 1
    %21 = vsyncpa %s20, 0
    loop: start=0, step=1, limit=4
    $region2: #{tpu_custom_call.1} parent=1 // loop_pre_header
      _
    $region3: #{tpu_custom_call.1} parent=1 // loop_header
      %s23 = sphi 0, %s27
      %p24 = scmp.ge.s32.totalorder %s23, 4
      %s33 = sphi 0, %s35
      %s36 = sphi 0, %s33
      %s37 = sphi 0, %s36
      %s53 = sphi 0, %s37
      %s57 = sphi 0, %s57
      %s59 = sphi 0, %s57
      %s60 = sphi 0, %s59
      %s74 = sphi 0, %s60
      %s78 = sphi 0, %s78
      %s80 = sphi 0, %s78
      %s81 = sphi 0, %s80
      %s95 = sphi 0, %s81
      %s99 = sphi 0, %s99
      %s101 = sphi 0, %s99
      %s102 = sphi 0, %s101
      %s116 = sphi 0, %s102
      %s120 = sphi 0, %s120
      %s122 = sphi 0, %s120
      %s123 = sphi 0, %s122
      %s137 = sphi 0, %s123
      %s143 = sphi 0, %s145
      %s146 = sphi 0, %s143
      %s147 = sphi 0, %s146
      %s163 = sphi 0, %s147
      %s169 = sphi 0, %s171
      %s172 = sphi 0, %s169
      %s173 = sphi 0, %s172
      %s189 = sphi 0, %s173
    $region4: #{tpu_custom_call.1} parent=1 // loop_header_branch
      %26 = sbr.rel (%p24) target = $region8
    $region5: #{tpu_custom_call.1} parent=1 // loop_body
      %s28 = ssub.s32 %s23, 1
      %s29 = ssub.s32 %s23, 2
      %s30 = sadd.s32 %s23, 1
      %s31 = ssub.s32 %s23, %s30
      %p32 = scmp.eq.s32.totalorder %s31, 0
      %s34 = sadd.s32 %s33, 1
      %s35 = scalar_select %p32, %s33, %s34
      %p38 = pneg %p32
      %p39 = scmp.eq.s32.totalorder %s23, 1
      %p40 = por %p38, %p39
      %p41 = scmp.ne.s32.totalorder %s33, %s36
      %p42 = scmp.eq.s32.totalorder %s23, 0
      %p43 = por %p41, %p42
      %p44 = scmp.ne.s32.totalorder %s33, %s36
      %p45 = scmp.eq.s32.totalorder %s28, 1
      %p46 = por %p44, %p45
      %p47 = scmp.ne.s32.totalorder %s36, %s37
      %p48 = scmp.eq.s32.totalorder %s28, 0
      %p49 = por %p47, %p48
      %p50 = scmp.ne.s32.totalorder %s36, %s37
      %p51 = scmp.eq.s32.totalorder %s29, 1
      %p52 = por %p50, %p51
      %p54 = scmp.ne.s32.totalorder %s37, %s53
      %p55 = scmp.eq.s32.totalorder %s29, 0
      %p56 = por %p54, %p55
      %s58 = sadd.s32 %s57, 1
      %p61 = scmp.eq.s32.totalorder %s23, 1
      %p62 = scmp.ne.s32.totalorder %s57, %s59
      %p63 = scmp.eq.s32.totalorder %s23, 0
      %p64 = por %p62, %p63
      %p65 = scmp.ne.s32.totalorder %s57, %s59
      %p66 = scmp.eq.s32.totalorder %s28, 1
      %p67 = por %p65, %p66
      %p68 = scmp.ne.s32.totalorder %s59, %s60
      %p69 = scmp.eq.s32.totalorder %s28, 0
      %p70 = por %p68, %p69
      %p71 = scmp.ne.s32.totalorder %s59, %s60
      %p72 = scmp.eq.s32.totalorder %s29, 1
      %p73 = por %p71, %p72
      %p75 = scmp.ne.s32.totalorder %s60, %s74
      %p76 = scmp.eq.s32.totalorder %s29, 0
      %p77 = por %p75, %p76
      %s79 = sadd.s32 %s78, 1
      %p82 = scmp.eq.s32.totalorder %s23, 1
      %p83 = scmp.ne.s32.totalorder %s78, %s80
      %p84 = scmp.eq.s32.totalorder %s23, 0
      %p85 = por %p83, %p84
      %p86 = scmp.ne.s32.totalorder %s78, %s80
      %p87 = scmp.eq.s32.totalorder %s28, 1
      %p88 = por %p86, %p87
      %p89 = scmp.ne.s32.totalorder %s80, %s81
      %p90 = scmp.eq.s32.totalorder %s28, 0
      %p91 = por %p89, %p90
      %p92 = scmp.ne.s32.totalorder %s80, %s81
      %p93 = scmp.eq.s32.totalorder %s29, 1
      %p94 = por %p92, %p93
      %p96 = scmp.ne.s32.totalorder %s81, %s95
      %p97 = scmp.eq.s32.totalorder %s29, 0
      %p98 = por %p96, %p97
      %s100 = sadd.s32 %s99, 1
      %p103 = scmp.eq.s32.totalorder %s23, 1
      %p104 = scmp.ne.s32.totalorder %s99, %s101
      %p105 = scmp.eq.s32.totalorder %s23, 0
      %p106 = por %p104, %p105
      %p107 = scmp.ne.s32.totalorder %s99, %s101
      %p108 = scmp.eq.s32.totalorder %s28, 1
      %p109 = por %p107, %p108
      %p110 = scmp.ne.s32.totalorder %s101, %s102
      %p111 = scmp.eq.s32.totalorder %s28, 0
      %p112 = por %p110, %p111
      %p113 = scmp.ne.s32.totalorder %s101, %s102
      %p114 = scmp.eq.s32.totalorder %s29, 1
      %p115 = por %p113, %p114
      %p117 = scmp.ne.s32.totalorder %s102, %s116
      %p118 = scmp.eq.s32.totalorder %s29, 0
      %p119 = por %p117, %p118
      %s121 = sadd.s32 %s120, 1
      %p124 = scmp.eq.s32.totalorder %s23, 1
      %p125 = scmp.ne.s32.totalorder %s120, %s122
      %p126 = scmp.eq.s32.totalorder %s23, 0
      %p127 = por %p125, %p126
      %p128 = scmp.ne.s32.totalorder %s120, %s122
      %p129 = scmp.eq.s32.totalorder %s28, 1
      %p130 = por %p128, %p129
      %p131 = scmp.ne.s32.totalorder %s122, %s123
      %p132 = scmp.eq.s32.totalorder %s28, 0
      %p133 = por %p131, %p132
      %p134 = scmp.ne.s32.totalorder %s122, %s123
      %p135 = scmp.eq.s32.totalorder %s29, 1
      %p136 = por %p134, %p135
      %p138 = scmp.ne.s32.totalorder %s123, %s137
      %p139 = scmp.eq.s32.totalorder %s29, 0
      %p140 = por %p138, %p139
      %s141 = ssub.s32 %s23, %s30
      %p142 = scmp.eq.s32.totalorder %s141, 0
      %s144 = sadd.s32 %s143, 1
      %s145 = scalar_select %p142, %s143, %s144
      %p148 = pneg %p142
      %p149 = scmp.eq.s32.totalorder %s23, 1
      %p150 = por %p148, %p149
      %p151 = scmp.ne.s32.totalorder %s143, %s146
      %p152 = scmp.eq.s32.totalorder %s23, 0
      %p153 = por %p151, %p152
      %p154 = scmp.ne.s32.totalorder %s143, %s146
      %p155 = scmp.eq.s32.totalorder %s28, 1
      %p156 = por %p154, %p155
      %p157 = scmp.ne.s32.totalorder %s146, %s147
      %p158 = scmp.eq.s32.totalorder %s28, 0
      %p159 = por %p157, %p158
      %p160 = scmp.ne.s32.totalorder %s146, %s147
      %p161 = scmp.eq.s32.totalorder %s29, 1
      %p162 = por %p160, %p161
      %p164 = scmp.ne.s32.totalorder %s147, %s163
      %p165 = scmp.eq.s32.totalorder %s29, 0
      %p166 = por %p164, %p165
      %s167 = ssub.s32 %s23, %s30
      %p168 = scmp.eq.s32.totalorder %s167, 0
      %s170 = sadd.s32 %s169, 1
      %s171 = scalar_select %p168, %s169, %s170
      %p174 = pneg %p168
      %p175 = scmp.eq.s32.totalorder %s23, 1
      %p176 = por %p174, %p175
      %p177 = scmp.ne.s32.totalorder %s169, %s172
      %p178 = scmp.eq.s32.totalorder %s23, 0
      %p179 = por %p177, %p178
      %p180 = scmp.ne.s32.totalorder %s169, %s172
      %p181 = scmp.eq.s32.totalorder %s28, 1
      %p182 = por %p180, %p181
      %p183 = scmp.ne.s32.totalorder %s172, %s173
      %p184 = scmp.eq.s32.totalorder %s28, 0
      %p185 = por %p183, %p184
      %p186 = scmp.ne.s32.totalorder %s172, %s173
      %p187 = scmp.eq.s32.totalorder %s29, 1
      %p188 = por %p186, %p187
      %p190 = scmp.ne.s32.totalorder %s173, %s189
      %p191 = scmp.eq.s32.totalorder %s29, 0
      %p192 = por %p190, %p191
      %p193 = scmp.le.s32.totalorder 1, %s23
      %p194 = scmp.lt.s32.totalorder %s23, 3
      %p195 = pnand %p193, %p194
      %p196 = pneg %p195
      // Predicated region
      $region9: #{tpu_custom_call.1} parent=5 // pred_check
        _
      $region10: #{tpu_custom_call.1} parent=5 // pred_check_branch
        %198 = sbr.rel (%p195) target = $region12
      $region11: #{tpu_custom_call.1} parent=5 // pred_region
        %s199 = ssub.s32 %s23, 1
        // Predicated region
        $region13: #{tpu_custom_call.1} parent=11 // pred_check
          %p200 = pneg %p70
        $region14: #{tpu_custom_call.1} parent=11 // pred_check_branch
          %202 = sbr.rel (%p200) target = $region16
        $region15: #{tpu_custom_call.1} parent=11 // pred_region
          %s204 = ssub.s32 256, 256
          %205 = vsyncadd [#allocation6], %s204
          %s206 = sshll.u32 [#allocation5], 4
          %s207 = int_to_ptr.vmem [resolvable:$true] %s206
          %212 = dma.hbm_to_vmem [thread:$0]  %s1, 256, %s207, [#allocation6], 64, 64, 4
        $region16: #{tpu_custom_call.1} parent=11 // pred_fallthru
          _
        // Predicated region
        $region17: #{tpu_custom_call.1} parent=11 // pred_check
          %p213 = pneg %p91
        $region18: #{tpu_custom_call.1} parent=11 // pred_check_branch
          %215 = sbr.rel (%p213) target = $region20
        $region19: #{tpu_custom_call.1} parent=11 // pred_region
          _
        $region20: #{tpu_custom_call.1} parent=11 // pred_fallthru
          _
        // Predicated region
        $region21: #{tpu_custom_call.1} parent=11 // pred_check
          %p216 = pneg %p112
        $region22: #{tpu_custom_call.1} parent=11 // pred_check_branch
          %218 = sbr.rel (%p216) target = $region24
        $region23: #{tpu_custom_call.1} parent=11 // pred_region
          %s220 = ssub.s32 256, 256
          %221 = vsyncadd [#allocation6], %s220
          %s222 = sshll.u32 [#allocation7], 4
          %s223 = int_to_ptr.vmem [resolvable:$true] %s222
          %228 = dma.hbm_to_vmem [thread:$0]  %s3, 256, %s223, [#allocation6], 64, 64, 4
        $region24: #{tpu_custom_call.1} parent=11 // pred_fallthru
          _
        // Predicated region
        $region25: #{tpu_custom_call.1} parent=11 // pred_check
          %p229 = pneg %p133
        $region26: #{tpu_custom_call.1} parent=11 // pred_check_branch
          %231 = sbr.rel (%p229) target = $region28
        $region27: #{tpu_custom_call.1} parent=11 // pred_region
          _
        $region28: #{tpu_custom_call.1} parent=11 // pred_fallthru
          _
      $region12: #{tpu_custom_call.1} parent=5 // pred_fallthru
        _
      %p232 = scmp.lt.s32.totalorder %s23, 2
      // Predicated region
      $region29: #{tpu_custom_call.1} parent=5 // pred_check
        %p233 = pneg %p232
      $region30: #{tpu_custom_call.1} parent=5 // pred_check_branch
        %235 = sbr.rel (%p233) target = $region32
      $region31: #{tpu_custom_call.1} parent=5 // pred_region
        // Predicated region
        $region33: #{tpu_custom_call.1} parent=31 // pred_check
          %p236 = pneg %p43
        $region34: #{tpu_custom_call.1} parent=31 // pred_check_branch
          %238 = sbr.rel (%p236) target = $region36
        $region35: #{tpu_custom_call.1} parent=31 // pred_region
          %s239 = sand.u32 %s33, 1
          %s240 = scalar_lea.sflag [#allocation3], %s239
          %s241 = sand.u32 %s33, 1
          %s242 = smul.addr %s241, 16
          %s243 = scalar_lea.vmem [#allocation2], %s242
          %s244 = smul.u32 2, %s23
          %s246 = ssub.s32 256, 256
          %247 = vsyncadd %s240, %s246
          %s248 = smul.addr %s244, 128
          %s249 = scalar_lea.hbm %s0, %s248
          %s250 = sshll.u32 %s243, 4
          %s251 = int_to_ptr.vmem [resolvable:$true] %s250
          %256 = dma.hbm_to_vmem [thread:$0]  %s249, 256, %s251, %s240, 128, 128, 8
        $region36: #{tpu_custom_call.1} parent=31 // pred_fallthru
          _
      $region32: #{tpu_custom_call.1} parent=5 // pred_fallthru
        _
      %p257 = scmp.le.s32.totalorder 1, %s23
      %p258 = scmp.lt.s32.totalorder %s23, 3
      %p259 = pnand %p257, %p258
      %p260 = pneg %p259
      // Predicated region
      $region37: #{tpu_custom_call.1} parent=5 // pred_check
        _
      $region38: #{tpu_custom_call.1} parent=5 // pred_check_branch
        %262 = sbr.rel (%p259) target = $region40
      $region39: #{tpu_custom_call.1} parent=5 // pred_region
        %s263 = ssub.s32 %s23, 1
        %s264 = sand.u32 %s36, 1
        %s265 = scalar_lea.sflag [#allocation3], %s264
        %s266 = sand.u32 %s36, 1
        %s267 = smul.addr %s266, 16
        %s268 = scalar_lea.vmem [#allocation2], %s267
        // Predicated region
        $region41: #{tpu_custom_call.1} parent=39 // pred_check
          %p269 = pneg %p49
        $region42: #{tpu_custom_call.1} parent=39 // pred_check_branch
          %271 = sbr.rel (%p269) target = $region44
        $region43: #{tpu_custom_call.1} parent=39 // pred_region
          %272 = dma.done %s265, 256
        $region44: #{tpu_custom_call.1} parent=39 // pred_fallthru
          _
        // Predicated region
        $region45: #{tpu_custom_call.1} parent=39 // pred_check
          %p273 = pneg %p70
        $region46: #{tpu_custom_call.1} parent=39 // pred_check_branch
          %275 = sbr.rel (%p273) target = $region48
        $region47: #{tpu_custom_call.1} parent=39 // pred_region
          %276 = dma.done [#allocation6], 256
        $region48: #{tpu_custom_call.1} parent=39 // pred_fallthru
          _
        // Predicated region
        $region49: #{tpu_custom_call.1} parent=39 // pred_check
          %p277 = pneg %p112
        $region50: #{tpu_custom_call.1} parent=39 // pred_check_branch
          %279 = sbr.rel (%p277) target = $region52
        $region51: #{tpu_custom_call.1} parent=39 // pred_region
          %280 = dma.done [#allocation6], 256
        $region52: #{tpu_custom_call.1} parent=39 // pred_fallthru
          _
        %s281 = sand.u32 %s36, 1
        %s282 = scalar_lea.sflag [#allocation3], %s281
        %s283 = sand.u32 %s36, 1
        %s284 = smul.addr %s283, 16
        %s285 = scalar_lea.vmem [#allocation2], %s284
        %p286 = pneg %p49
        %p287 = pneg %p46
        %p288 = pneg %p70
        %p289 = pneg %p67
        %p290 = pneg %p91
        %p291 = pneg %p88
        %p292 = pneg %p112
        %p293 = pneg %p109
        %p294 = pneg %p133
        %p295 = pneg %p130
        %p296 = pneg %p159
        %p297 = pneg %p156
        %s298 = sand.u32 %s146, 1
        %s299 = scalar_lea.sflag [#allocation4], %s298
        %s300 = sand.u32 %s146, 1
        %s301 = smul.addr %s300, 16
        %s302 = scalar_lea.vmem [#allocation8], %s301
        %p303 = pneg %p185
        %p304 = pneg %p182
        %s305 = sand.u32 %s172, 1
        %s306 = scalar_lea.sflag [#allocation10], %s305
        %s307 = sand.u32 %s172, 1
        %s308 = smul.addr %s307, 2
        %s309 = scalar_lea.vmem [#allocation9], %s308
        %s310 = smul.u32 2, %s28
        %s311 = smul.u32 2, %s28
        %s312 = smul.u32 2, %s28
        %v314 = vld [vmem:[%s268] sm:$0xff]
        %v315 = vld [vmem:[%s268 + $0x8] sm:$0xff]
        %v316 = vpack.c.bf16 %v315, %v314
        %v317 = vld [vmem:[#allocation5] sm:$0xf]
        %v318 = vld [vmem:[#allocation5 + $0x4] sm:$0xf]
        %v319 = vld [vmem:[#allocation5 + $0x8] sm:$0xf]
        %v320 = vld [vmem:[#allocation5 + $0xc] sm:$0xf]
        %v321 = vld [vmem:[%s2] sm:$0x1]
        %v323 = vlaneseq
        %v324 = vshrl.u32 %v323, 7
        %v325 = vsub.s32 0, %v324
        %v326 = vrot.slane %v321, %v325
        %v332 = vunpack.c.l.b16 %v317
        %v333 = vunpack.c.l.b16 %v318
        %v334 = vunpack.c.l.b16 %v319
        %v335 = vunpack.c.l.b16 %v320
        %v336 = vpack.c.b16 %v333, %v332
        %v337 = vpack.c.b16 %v335, %v334
        %vm340 = vcmask 261120
        %v342 = vsel %vm340, %v316, 0
        %344 = vmatprep.subr.bf16.mxu0 0
        %345 = vmatpush1.bf16.msra.mxu0 0
        %346 = vmatprep.subr.bf16.mxu0 0
        %347 = vmatpush1.bf16.msra.mxu0 0
        %348 = vmatprep.subr.bf16.mxu0 0
        %349 = vmatpush1.bf16.msra.mxu0 0
        %350 = vmatprep.subr.bf16.mxu0 0
        %351 = vmatpush1.bf16.msra.mxu0 0
        %352 = vmatprep.subr.bf16.mxu0 0
        %353 = vmatpush1.bf16.msra.mxu0 0
        %354 = vmatprep.subr.bf16.mxu0 0
        %355 = vmatpush1.bf16.msra.mxu0 0
        %356 = vmatprep.subr.bf16.mxu0 0
        %357 = vmatpush1.bf16.msra.mxu0 %v337
        %358 = vmatprep.subr.bf16.mxu0 0
        %359 = vmatpush1.bf16.msra.mxu0 %v336
        %360 = vmatprep.subr.bf16.mxu0 0
        %361 = vmatpush2.bf16.msra.mxu0 0
        %362 = vmatprep.subr.bf16.mxu0 0
        %363 = vmatpush2.bf16.msra.mxu0 0
        %364 = vmatprep.subr.bf16.mxu0 0
        %365 = vmatpush2.bf16.msra.mxu0 0
        %366 = vmatprep.subr.bf16.mxu0 0
        %367 = vmatpush2.bf16.msra.mxu0 0
        %368 = vmatprep.subr.bf16.mxu0 0
        %369 = vmatpush2.bf16.msra.mxu0 0
        %370 = vmatprep.subr.bf16.mxu0 0
        %371 = vmatpush2.bf16.msra.mxu0 0
        %372 = vmatprep.subr.bf16.mxu0 0
        %373 = vmatpush2.bf16.msra.mxu0 0
        %374 = vmatprep.subr.bf16.mxu0 0
        %375 = vmatpush2.bf16.msra.mxu0 0
        %376 = vmatprep.mubr.bf16.mxu0 0
        %377 = vmatmul.mubr.bf16.gmra.mxu0 %v342
        %v378 = vpop.f32.mrf.mxu0
        %v379 = vadd.f32 %v326, %v378
        %v380 = vpop.f32.mrf.mxu0
        %v381 = vpop.f32.mrf.mxu0
        %v382 = vadd.f32 %v326, %v381
        %v383 = vpop.f32.mrf.mxu0
        %384 = vdwg.mxu0
        %v385 = vmul.f32 %v379, 0.17677669
        %v386 = vmul.f32 %v382, 0.17677669
        %v387 = vpack.c.bf16 %v385, %v385
        %v388 = vpack.c.bf16 %v386, %v386
        %v389 = vpack.c.bf16 %v379, %v379
        %v390 = vpack.c.bf16 %v382, %v382
        %392 = vrot.lane.b32.xlu0 %v389, 96
        %v393 = vpop.permute.xlu0 %392
        %v395 = vsel %vm340, %v387, 0
        %v398 = vsel %vm340, %v393, 0
        %400 = vmatprep.subr.bf16.mxu0 0
        %401 = vmatpush1.bf16.xpose.msra.mxu0 0
        %402 = vmatprep.subr.bf16.mxu0 0
        %403 = vmatpush1.bf16.xpose.msra.mxu0 0
        %404 = vmatprep.subr.bf16.mxu0 0
        %405 = vmatpush1.bf16.xpose.msra.mxu0 0
        %406 = vmatprep.subr.bf16.mxu0 0
        %407 = vmatpush1.bf16.xpose.msra.mxu0 0
        %408 = vmatprep.subr.bf16.mxu0 0
        %409 = vmatpush1.bf16.xpose.msra.mxu0 0
        %410 = vmatprep.subr.bf16.mxu0 0
        %411 = vmatpush1.bf16.xpose.msra.mxu0 0
        %412 = vmatprep.subr.bf16.mxu0 0
        %413 = vmatpush1.bf16.xpose.msra.mxu0 0
        %414 = vmatprep.subr.bf16.mxu0 0
        %415 = vmatpush1.bf16.xpose.msra.mxu0 %v398
        %416 = vmatprep.subr.bf16.mxu0 0
        %417 = vmatpush2.bf16.xpose.msra.mxu0 0
        %418 = vmatprep.subr.bf16.mxu0 0
        %419 = vmatpush2.bf16.xpose.msra.mxu0 0
        %420 = vmatprep.subr.bf16.mxu0 0
        %421 = vmatpush2.bf16.xpose.msra.mxu0 0
        %422 = vmatprep.subr.bf16.mxu0 0
        %423 = vmatpush2.bf16.xpose.msra.mxu0 0
        %424 = vmatprep.subr.bf16.mxu0 0
        %425 = vmatpush2.bf16.xpose.msra.mxu0 0
        %426 = vmatprep.subr.bf16.mxu0 0
        %427 = vmatpush2.bf16.xpose.msra.mxu0 0
        %428 = vmatprep.subr.bf16.mxu0 0
        %429 = vmatpush2.bf16.xpose.msra.mxu0 0
        %430 = vmatprep.subr.bf16.mxu0 0
        %431 = vmatpush2.bf16.xpose.msra.mxu0 0
        %432 = vmatprep.mubr.bf16.mxu0 0
        %433 = vmatmul.mubr.bf16.gmra.mxu0 %v395
        %v434 = vpop.f32.mrf.mxu0
        %v435 = vadd.f32 0.0, %v434
        %v436 = vpop.f32.mrf.mxu0
        %v437 = vpop.f32.mrf.mxu0
        %v438 = vpop.f32.mrf.mxu0
        %439 = vdwg.mxu0
        %441 = vrot.lane.b32.xlu0 %v390, 96
        %v442 = vpop.permute.xlu0 %441
        %v444 = vsel %vm340, %v388, 0
        %v447 = vsel %vm340, %v442, 0
        %449 = vmatprep.subr.bf16.mxu0 0
        %450 = vmatpush1.bf16.xpose.msra.mxu0 0
        %451 = vmatprep.subr.bf16.mxu0 0
        %452 = vmatpush1.bf16.xpose.msra.mxu0 0
        %453 = vmatprep.subr.bf16.mxu0 0
        %454 = vmatpush1.bf16.xpose.msra.mxu0 0
        %455 = vmatprep.subr.bf16.mxu0 0
        %456 = vmatpush1.bf16.xpose.msra.mxu0 0
        %457 = vmatprep.subr.bf16.mxu0 0
        %458 = vmatpush1.bf16.xpose.msra.mxu0 0
        %459 = vmatprep.subr.bf16.mxu0 0
        %460 = vmatpush1.bf16.xpose.msra.mxu0 0
        %461 = vmatprep.subr.bf16.mxu0 0
        %462 = vmatpush1.bf16.xpose.msra.mxu0 0
        %463 = vmatprep.subr.bf16.mxu0 0
        %464 = vmatpush1.bf16.xpose.msra.mxu0 %v447
        %465 = vmatprep.subr.bf16.mxu0 0
        %466 = vmatpush2.bf16.xpose.msra.mxu0 0
        %467 = vmatprep.subr.bf16.mxu0 0
        %468 = vmatpush2.bf16.xpose.msra.mxu0 0
        %469 = vmatprep.subr.bf16.mxu0 0
        %470 = vmatpush2.bf16.xpose.msra.mxu0 0
        %471 = vmatprep.subr.bf16.mxu0 0
        %472 = vmatpush2.bf16.xpose.msra.mxu0 0
        %473 = vmatprep.subr.bf16.mxu0 0
        %474 = vmatpush2.bf16.xpose.msra.mxu0 0
        %475 = vmatprep.subr.bf16.mxu0 0
        %476 = vmatpush2.bf16.xpose.msra.mxu0 0
        %477 = vmatprep.subr.bf16.mxu0 0
        %478 = vmatpush2.bf16.xpose.msra.mxu0 0
        %479 = vmatprep.subr.bf16.mxu0 0
        %480 = vmatpush2.bf16.xpose.msra.mxu0 0
        %481 = vmatprep.mubr.bf16.mxu0 0
        %482 = vmatmul.mubr.bf16.gmra.mxu0 %v444
        %v483 = vpop.f32.mrf.mxu0
        %v484 = vadd.f32 0.0, %v483
        %v485 = vpop.f32.mrf.mxu0
        %v486 = vpop.f32.mrf.mxu0
        %v487 = vpop.f32.mrf.mxu0
        %488 = vdwg.mxu0
        %vm489 = vcmask 64512
        %v490 = vsel %vm489, %v435, -inf
        %491 = vmax.xlane.f32.xlu0 %v490
        %v492 = vpop.xlane.xlu0 %491
        %v493 = vsel %vm489, %v484, -inf
        %494 = vmax.xlane.f32.xlu0 %v493
        %v495 = vpop.xlane.xlu0 %494
        %v496 = vsub.f32 %v435, %v492
        %v497 = vsub.f32 %v484, %v495
        %v498 = vmul.f32 %v496, 1.442695
        %v499 = vpow.pop %v498
        %v500 = vmul.f32 %v497, 1.442695
        %v501 = vpow.pop %v500
        %v502 = vsel %vm489, %v499, 0.0
        %503 = vadd.xlane.f32.xlu0 %v502
        %v504 = vpop.xlane.xlu0 %503
        %v505 = vsel %vm489, %v501, 0.0
        %506 = vadd.xlane.f32.xlu0 %v505
        %v507 = vpop.xlane.xlu0 %506
        %v508 = vrcp.pop %v504
        %v509 = vrcp.pop %v507
        %v510 = vmul.f32 %v499, %v508
        %v511 = vmul.f32 %v501, %v509
        %512 = vst.msk [vmem:[%s302] sm:$0xff] %vm489, %v510
        %513 = vst.msk [vmem:[%s302 + $0x8] sm:$0xff] %vm489, %v511
        %v514 = vpack.c.bf16 %v510, %v510
        %v515 = vpack.c.bf16 %v511, %v511
        %516 = vrot.lane.b32.xlu0 %v389, 64
        %v517 = vpop.permute.xlu0 %516
        %v519 = vsel %vm489, %v514, 0
        %vm521 = vcmask 1043456
        %v523 = vsel %vm521, %v517, 0
        %525 = vmatprep.subr.bf16.mxu0 0
        %526 = vmatpush1.bf16.msra.mxu0 0
        %527 = vmatprep.subr.bf16.mxu0 0
        %528 = vmatpush1.bf16.msra.mxu0 0
        %529 = vmatprep.subr.bf16.mxu0 0
        %530 = vmatpush1.bf16.msra.mxu0 0
        %531 = vmatprep.subr.bf16.mxu0 0
        %532 = vmatpush1.bf16.msra.mxu0 0
        %533 = vmatprep.subr.bf16.mxu0 0
        %534 = vmatpush1.bf16.msra.mxu0 0
        %535 = vmatprep.subr.bf16.mxu0 0
        %536 = vmatpush1.bf16.msra.mxu0 0
        %537 = vmatprep.subr.bf16.mxu0 0
        %538 = vmatpush1.bf16.msra.mxu0 0
        %539 = vmatprep.subr.bf16.mxu0 0
        %540 = vmatpush1.bf16.msra.mxu0 %v523
        %541 = vmatprep.subr.bf16.mxu0 0
        %542 = vmatpush2.bf16.msra.mxu0 0
        %543 = vmatprep.subr.bf16.mxu0 0
        %544 = vmatpush2.bf16.msra.mxu0 0
        %545 = vmatprep.subr.bf16.mxu0 0
        %546 = vmatpush2.bf16.msra.mxu0 0
        %547 = vmatprep.subr.bf16.mxu0 0
        %548 = vmatpush2.bf16.msra.mxu0 0
        %549 = vmatprep.subr.bf16.mxu0 0
        %550 = vmatpush2.bf16.msra.mxu0 0
        %551 = vmatprep.subr.bf16.mxu0 0
        %552 = vmatpush2.bf16.msra.mxu0 0
        %553 = vmatprep.subr.bf16.mxu0 0
        %554 = vmatpush2.bf16.msra.mxu0 0
        %555 = vmatprep.subr.bf16.mxu0 0
        %556 = vmatpush2.bf16.msra.mxu0 0
        %557 = vmatprep.mubr.bf16.mxu0 0
        %558 = vmatmul.mubr.bf16.gmra.mxu0 %v519
        %v559 = vpop.f32.mrf.mxu0
        %v560 = vadd.f32 0.0, %v559
        %v561 = vpop.f32.mrf.mxu0
        %v562 = vpop.f32.mrf.mxu0
        %v563 = vpop.f32.mrf.mxu0
        %564 = vdwg.mxu0
        %565 = vrot.lane.b32.xlu0 %v390, 64
        %v566 = vpop.permute.xlu0 %565
        %v568 = vsel %vm489, %v515, 0
        %v571 = vsel %vm521, %v566, 0
        %573 = vmatprep.subr.bf16.mxu0 0
        %574 = vmatpush1.bf16.msra.mxu0 0
        %575 = vmatprep.subr.bf16.mxu0 0
        %576 = vmatpush1.bf16.msra.mxu0 0
        %577 = vmatprep.subr.bf16.mxu0 0
        %578 = vmatpush1.bf16.msra.mxu0 0
        %579 = vmatprep.subr.bf16.mxu0 0
        %580 = vmatpush1.bf16.msra.mxu0 0
        %581 = vmatprep.subr.bf16.mxu0 0
        %582 = vmatpush1.bf16.msra.mxu0 0
        %583 = vmatprep.subr.bf16.mxu0 0
        %584 = vmatpush1.bf16.msra.mxu0 0
        %585 = vmatprep.subr.bf16.mxu0 0
        %586 = vmatpush1.bf16.msra.mxu0 0
        %587 = vmatprep.subr.bf16.mxu0 0
        %588 = vmatpush1.bf16.msra.mxu0 %v571
        %589 = vmatprep.subr.bf16.mxu0 0
        %590 = vmatpush2.bf16.msra.mxu0 0
        %591 = vmatprep.subr.bf16.mxu0 0
        %592 = vmatpush2.bf16.msra.mxu0 0
        %593 = vmatprep.subr.bf16.mxu0 0
        %594 = vmatpush2.bf16.msra.mxu0 0
        %595 = vmatprep.subr.bf16.mxu0 0
        %596 = vmatpush2.bf16.msra.mxu0 0
        %597 = vmatprep.subr.bf16.mxu0 0
        %598 = vmatpush2.bf16.msra.mxu0 0
        %599 = vmatprep.subr.bf16.mxu0 0
        %600 = vmatpush2.bf16.msra.mxu0 0
        %601 = vmatprep.subr.bf16.mxu0 0
        %602 = vmatpush2.bf16.msra.mxu0 0
        %603 = vmatprep.subr.bf16.mxu0 0
        %604 = vmatpush2.bf16.msra.mxu0 0
        %605 = vmatprep.mubr.bf16.mxu0 0
        %606 = vmatmul.mubr.bf16.gmra.mxu0 %v568
        %v607 = vpop.f32.mrf.mxu0
        %v608 = vadd.f32 0.0, %v607
        %v609 = vpop.f32.mrf.mxu0
        %v610 = vpop.f32.mrf.mxu0
        %v611 = vpop.f32.mrf.mxu0
        %612 = vdwg.mxu0
        %v613 = vpack.c.bf16 %v560, %v560
        %v614 = vpack.c.bf16 %v608, %v608
        %v615 = vld [vmem:[#allocation7] sm:$0xf]
        %v616 = vld [vmem:[#allocation7 + $0x4] sm:$0xf]
        %v617 = vld [vmem:[#allocation7 + $0x8] sm:$0xf]
        %v618 = vld [vmem:[#allocation7 + $0xc] sm:$0xf]
        %v619 = vld [vmem:[%s4] sm:$0x1]
        %v621 = vlaneseq
        %v622 = vshrl.u32 %v621, 7
        %v623 = vsub.s32 0, %v622
        %v624 = vrot.slane %v619, %v623
        %v628 = vunpack.c.l.b16 %v613
        %v629 = vunpack.c.l.b16 %v614
        %v630 = vrot.slane %v629, 7
        %vm631 = vcmask 1041409
        %v632 = vsel %vm631, %v630, %v628
        %v633 = vpack.c.b16 %v632, %v632
        %v638 = vunpack.c.l.b16 %v615
        %v639 = vunpack.c.l.b16 %v616
        %v640 = vunpack.c.l.b16 %v617
        %v641 = vunpack.c.l.b16 %v618
        %v642 = vpack.c.b16 %v639, %v638
        %v643 = vpack.c.b16 %v641, %v640
        %v647 = vsel %vm340, %v633, 0
        %649 = vmatprep.subr.bf16.mxu0 0
        %650 = vmatpush1.bf16.msra.mxu0 0
        %651 = vmatprep.subr.bf16.mxu0 0
        %652 = vmatpush1.bf16.msra.mxu0 0
        %653 = vmatprep.subr.bf16.mxu0 0
        %654 = vmatpush1.bf16.msra.mxu0 0
        %655 = vmatprep.subr.bf16.mxu0 0
        %656 = vmatpush1.bf16.msra.mxu0 0
        %657 = vmatprep.subr.bf16.mxu0 0
        %658 = vmatpush1.bf16.msra.mxu0 0
        %659 = vmatprep.subr.bf16.mxu0 0
        %660 = vmatpush1.bf16.msra.mxu0 0
        %661 = vmatprep.subr.bf16.mxu0 0
        %662 = vmatpush1.bf16.msra.mxu0 %v643
        %663 = vmatprep.subr.bf16.mxu0 0
        %664 = vmatpush1.bf16.msra.mxu0 %v642
        %665 = vmatprep.subr.bf16.mxu0 0
        %666 = vmatpush2.bf16.msra.mxu0 0
        %667 = vmatprep.subr.bf16.mxu0 0
        %668 = vmatpush2.bf16.msra.mxu0 0
        %669 = vmatprep.subr.bf16.mxu0 0
        %670 = vmatpush2.bf16.msra.mxu0 0
        %671 = vmatprep.subr.bf16.mxu0 0
        %672 = vmatpush2.bf16.msra.mxu0 0
        %673 = vmatprep.subr.bf16.mxu0 0
        %674 = vmatpush2.bf16.msra.mxu0 0
        %675 = vmatprep.subr.bf16.mxu0 0
        %676 = vmatpush2.bf16.msra.mxu0 0
        %677 = vmatprep.subr.bf16.mxu0 0
        %678 = vmatpush2.bf16.msra.mxu0 0
        %679 = vmatprep.subr.bf16.mxu0 0
        %680 = vmatpush2.bf16.msra.mxu0 0
        %681 = vmatprep.mubr.bf16.mxu0 0
        %682 = vmatmul.mubr.bf16.gmra.mxu0 %v647
        %v683 = vpop.f32.mrf.mxu0
        %v684 = vadd.f32 %v624, %v683
        %v685 = vpop.f32.mrf.mxu0
        %v686 = vpop.f32.mrf.mxu0
        %v687 = vpop.f32.mrf.mxu0
        %688 = vdwg.mxu0
        %v690 = vrot.slane %v684, 1
        %v693 = vadd.f32 %v314, %v684
        %v694 = vadd.f32 %v315, %v690
        %vm695 = vcmask 253952
        %696 = vst.msk [vmem:[%s309] sm:$0x1] %vm695, %v693
        %697 = vst.msk [vmem:[%s309 + $0x1] sm:$0x1] %vm695, %v694
        %s698 = sand.u32 %s146, 1
        %s699 = scalar_lea.sflag [#allocation4], %s698
        %s700 = sand.u32 %s146, 1
        %s701 = smul.addr %s700, 16
        %s702 = scalar_lea.vmem [#allocation8], %s701
        %s703 = sand.u32 %s172, 1
        %s704 = scalar_lea.sflag [#allocation10], %s703
        %s705 = sand.u32 %s172, 1
        %s706 = smul.addr %s705, 2
        %s707 = scalar_lea.vmem [#allocation9], %s706
        // Predicated region
        $region53: #{tpu_custom_call.1} parent=39 // pred_check
          %p708 = pneg %p156
        $region54: #{tpu_custom_call.1} parent=39 // pred_check_branch
          %710 = sbr.rel (%p708) target = $region56
        $region55: #{tpu_custom_call.1} parent=39 // pred_region
          %s711 = smul.u32 2, %s28
          %s713 = ssub.s32 256, 256
          %714 = vsyncadd %s699, %s713
          %s715 = smul.addr %s711, 128
          %s716 = scalar_lea.hbm %s5, %s715
          %s717 = sshll.u32 %s702, 4
          %s718 = int_to_ptr.vmem [resolvable:$true] %s717
          %723 = dma.vmem_to_hbm [thread:$0]  %s718, 256, %s716, %s699, 128, 128, 8
        $region56: #{tpu_custom_call.1} parent=39 // pred_fallthru
          _
        // Predicated region
        $region57: #{tpu_custom_call.1} parent=39 // pred_check
          %p724 = pneg %p182
        $region58: #{tpu_custom_call.1} parent=39 // pred_check_branch
          %726 = sbr.rel (%p724) target = $region60
        $region59: #{tpu_custom_call.1} parent=39 // pred_region
          %s727 = smul.u32 2, %s28
          %s729 = ssub.s32 32, 32
          %730 = vsyncadd %s704, %s729
          %s731 = smul.addr %s727, 16
          %s732 = scalar_lea.hbm %s6, %s731
          %s733 = sshll.u32 %s707, 4
          %s734 = int_to_ptr.vmem [resolvable:$true] %s733
          %739 = dma.vmem_to_hbm [thread:$0]  %s734, 32, %s732, %s704, 16, 16, 1
        $region60: #{tpu_custom_call.1} parent=39 // pred_fallthru
          _
      $region40: #{tpu_custom_call.1} parent=5 // pred_fallthru
        _
      %p740 = scmp.le.s32.totalorder 2, %s23
      // Predicated region
      $region61: #{tpu_custom_call.1} parent=5 // pred_check
        %p741 = pneg %p740
      $region62: #{tpu_custom_call.1} parent=5 // pred_check_branch
        %743 = sbr.rel (%p741) target = $region64
      $region63: #{tpu_custom_call.1} parent=5 // pred_region
        %s744 = ssub.s32 %s23, 2
        // Predicated region
        $region65: #{tpu_custom_call.1} parent=63 // pred_check
          %p745 = pneg %p162
        $region66: #{tpu_custom_call.1} parent=63 // pred_check_branch
          %747 = sbr.rel (%p745) target = $region68
        $region67: #{tpu_custom_call.1} parent=63 // pred_region
          %s748 = sand.u32 %s147, 1
          %s749 = scalar_lea.sflag [#allocation4], %s748
          %s750 = sand.u32 %s147, 1
          %s751 = smul.addr %s750, 16
          %s752 = scalar_lea.vmem [#allocation8], %s751
          %753 = dma.done %s749, 256
        $region68: #{tpu_custom_call.1} parent=63 // pred_fallthru
          _
        // Predicated region
        $region69: #{tpu_custom_call.1} parent=63 // pred_check
          %p754 = pneg %p188
        $region70: #{tpu_custom_call.1} parent=63 // pred_check_branch
          %756 = sbr.rel (%p754) target = $region72
        $region71: #{tpu_custom_call.1} parent=63 // pred_region
          %s757 = sand.u32 %s173, 1
          %s758 = scalar_lea.sflag [#allocation10], %s757
          %s759 = sand.u32 %s173, 1
          %s760 = smul.addr %s759, 2
          %s761 = scalar_lea.vmem [#allocation9], %s760
          %762 = dma.done %s758, 32
        $region72: #{tpu_custom_call.1} parent=63 // pred_fallthru
          _
      $region64: #{tpu_custom_call.1} parent=5 // pred_fallthru
        _
    $region6: #{tpu_custom_call.1} parent=1 // loop_footer
      %s27 = sadd.s32 1, %s23
    $region7: #{tpu_custom_call.1} parent=1 // loop_footer_branch
      %22 = sbr.rel target = $region3
    $region8: #{tpu_custom_call.1} parent=1 // loop_exit
      _
    %763 = vsyncpa [#allocation3], 1
    %s764 = scalar_lea.sflag [#allocation3], 1
    %765 = vsyncpa %s764, 1
    %766 = vsyncpa [#allocation6], 1
    %767 = vsyncpa [#allocation4], 1
    %s768 = scalar_lea.sflag [#allocation4], 1
    %769 = vsyncpa %s768, 1
    %770 = vsyncpa [#allocation10], 1
    %s771 = scalar_lea.sflag [#allocation10], 1
    %772 = vsyncpa %s771, 1

</llo_original>
